<compile_context>
chip_gen: v5e
topology: v5e:2x2
jax: 0.10.0
libtpu: 0.0.40
codegen_flags: <defaults>
</compile_context>

<pallas_src>
import numpy as np
import jax
import jax.numpy as jnp
from jax.experimental import pallas as pl
from jax.experimental.pallas import tpu as pltpu


# ----------------------------------------------------------------------------
# Kernel
# ----------------------------------------------------------------------------
def embedding_grid_kernel(x_ref, p_ref, out_ref, acc_ref):
    """One grid step of the batched EmbeddingGrid forward.

    x_ref   : (tb, tm, E)  block of inputs (native dtype, e.g. f32/bf16)
    p_ref   : (E+1, E)     packed params [W^T ; b], f32, VMEM-resident
    out_ref : (tb, E)      output block (resident across the reduction axis)
    acc_ref : (tb, E) f32  VMEM scratch accumulator (device-sum)
    """
    E = out_ref.shape[-1]
    k = pl.program_id(1)                       # reduction step over num_dev

    @pl.when(k == 0)
    def _init():
        acc_ref[...] = jnp.zeros_like(acc_ref)

    # Partial sum over this block of devices (upcast in-kernel; f32 accumulate).
    acc_ref[...] += jnp.sum(x_ref[...].astype(jnp.float32), axis=1)

    @pl.when(k == pl.num_programs(1) - 1)
    def _finalize():
        # Linear: y = s @ W^T + b.  Static slices of the packed ref are free.
        wt = p_ref[0:E, :]                     # (E, E)  == W^T
        b = p_ref[E:E + 1, :]                  # (1, E)  == bias
        out_ref[...] = (
            jnp.dot(acc_ref[...], wt, preferred_element_type=jnp.float32) + b
        )


# ----------------------------------------------------------------------------
# Parameter packing (one-time, outside the per-call path)
# ----------------------------------------------------------------------------
def pack_params(W, b):
    """Pack nn.Linear(E, E) params as [W^T ; b] -> (E+1, E) f32."""
    W = jnp.asarray(W, jnp.float32)
    b = jnp.asarray(b, jnp.float32)
    E = W.shape[0]
    return jnp.concatenate([W.T, b.reshape(1, E)], axis=0)


# ----------------------------------------------------------------------------
# Tile-size helpers (respect the (8,128)/full-dim BlockSpec rule)
# ----------------------------------------------------------------------------
def _pick_tm(num_dev, cap=512):
    """Reduction-axis tile over num_dev: full dim if small, else a
    multiple-of-8 divisor up to `cap` (>=512 rows reach ~85% of HBM roofline)."""
    if num_dev <= cap:
        return num_dev
    start = (min(cap, num_dev) // 8) * 8
    for tm in range(start, 7, -8):
        if num_dev % tm == 0:
            return tm
    return num_dev          # no suitable divisor: fall back to a single block


def _pick_tb(B, cap=256):
    """Batch tile: full B if tiny, else a multiple-of-8 divisor (the output
    block (tb, E) then has >=8 sublane rows -> unmasked stores)."""
    if B <= 8:
        return B
    start = (min(cap, B) // 8) * 8
    for tb in range(start, 7, -8):
        if B % tb == 0:
            return tb
    return B                # block == full dim is always legal


# ----------------------------------------------------------------------------
# Wrappers
# ----------------------------------------------------------------------------
def embedding_grid_forward_batched(x, packed_params):
    """Batched forward: x (B, num_dev, E) native dtype -> (B, E) f32.

    Row i of the result equals EmbeddingGrid.forward(x[i]).
    """
    B, num_dev, E = x.shape
    tb = _pick_tb(B)
    tm = _pick_tm(num_dev)
    grid = (B // tb, num_dev // tm)

    return pl.pallas_call(
        embedding_grid_kernel,
        out_shape=jax.ShapeDtypeStruct((B, E), jnp.float32),
        grid_spec=pltpu.PrefetchScalarGridSpec(
            num_scalar_prefetch=0,
            grid=grid,
            in_specs=[
                # inputs: blocked over batch and devices
                pl.BlockSpec((tb, tm, E), lambda b, k: (b, k, 0)),
                # packed params: constant index_map -> DMA'd once, stays resident
                pl.BlockSpec((E + 1, E), lambda b, k: (0, 0)),
            ],
            # same output block across the reduction axis k (accumulator-resident)
            out_specs=pl.BlockSpec((tb, E), lambda b, k: (b, 0)),
            scratch_shapes=[pltpu.VMEM((tb, E), jnp.float32)],
        ),
        compiler_params=pltpu.CompilerParams(
            dimension_semantics=("parallel", "arbitrary"),
        ),
    )(x, packed_params)


def embedding_grid_forward(inputs, packed_params):
    """Single-instance forward matching the PyTorch module exactly:
    inputs (num_dev, E) -> (E,) f32."""
    out = embedding_grid_forward_batched(inputs[None], packed_params)
    return out[0]


# ----------------------------------------------------------------------------
# Self-test
# ----------------------------------------------------------------------------
if __name__ == "__main__":
    E = 32            # emb_size
    num_dev = 8
    B = 8             # batched instances (amortize dispatch; tb = 8 rows/store)

    key = jax.random.PRNGKey(0)
    k_x, k_w, k_b = jax.random.split(key, 3)

    # Deterministic inputs / parameters (shapes follow nn.Linear(E, E)).
    x = jax.random.uniform(k_x, (B, num_dev, E), jnp.float32, -1.0, 1.0)
    W = jax.random.uniform(k_w, (E, E), jnp.float32, -0.1, 0.1)
    b = jax.random.uniform(k_b, (E,), jnp.float32, -0.1, 0.1)

    packed = pack_params(W, b)                       # one-time, not per-call

    # Pure-numpy reference of EmbeddingGrid.forward per instance.
    x_np = np.asarray(x, np.float32)
    W_np = np.asarray(W, np.float32)
    b_np = np.asarray(b, np.float32)
    ref = x_np.sum(axis=1) @ W_np.T + b_np           # (B, E)

    # 1) Batched path (the primary, performance-oriented entry point).
    out_b = jax.block_until_ready(embedding_grid_forward_batched(x, packed))
    assert out_b.shape == (B, E)
    assert np.allclose(np.asarray(out_b), ref, rtol=1e-4, atol=1e-4), (
        np.max(np.abs(np.asarray(out_b) - ref))
    )

    # 2) Single-instance path — exact module semantics (num_dev, E) -> (E,).
    out_1 = jax.block_until_ready(embedding_grid_forward(x[0], packed))
    assert out_1.shape == (E,)
    assert np.allclose(np.asarray(out_1), ref[0], rtol=1e-4, atol=1e-4), (
        np.max(np.abs(np.asarray(out_1) - ref[0]))
    )

    # 3) Native-dtype path: bf16 inputs enter the kernel directly (no wrapper
    #    cast); upcast happens after the VMEM load, compute stays f32.
    x_bf16 = x.astype(jnp.bfloat16)
    out_bf = jax.block_until_ready(embedding_grid_forward_batched(x_bf16, packed))
    ref_bf = np.asarray(x_bf16, np.float32).sum(axis=1) @ W_np.T + b_np
    assert np.allclose(np.asarray(out_bf), ref_bf, rtol=2e-2, atol=2e-2), (
        np.max(np.abs(np.asarray(out_bf) - ref_bf))
    )

    print("KERNEL_OK")
</pallas_src>

<mosaic_0001>
module attributes {stable_mosaic.version = 11 : i64} {
  func.func @embedding_grid_kernel(%arg0: i32, %arg1: i32, %arg2: memref<8x8x32xf32, #tpu.memory_space<vmem>>, %arg3: memref<33x32xf32, #tpu.memory_space<vmem>>, %arg4: memref<8x32xf32, #tpu.memory_space<vmem>>, %arg5: memref<8x32xf32, #tpu.memory_space<vmem>>) attributes {dimension_semantics = [#tpu.dimension_semantics<parallel>, #tpu.dimension_semantics<arbitrary>], iteration_bounds = array<i64: 1, 1>, scalar_prefetch = 0 : i64, scratch_operands = 1 : i64, tpu.core_type = #tpu.core_type<tc>, window_params = [{transform_indices = @transform_0, window_bounds = array<i64: 8, 8, 32>}, {pipeline_mode = #tpu.pipeline_mode<synchronous>, transform_indices = @transform_1, window_bounds = array<i64: 33, 32>}, {transform_indices = @transform_2, window_bounds = array<i64: 8, 32>}]} {
    %c0_i32 = arith.constant 0 : i32
    %0 = arith.cmpi eq, %arg1, %c0_i32 : i32
    %1 = arith.extui %0 : i1 to i32
    %c0_i32_0 = arith.constant 0 : i32
    %2 = arith.cmpi ne, %1, %c0_i32_0 : i32
    scf.if %2 {
      %cst_9 = arith.constant 0.000000e+00 : f32
      %11 = vector.broadcast %cst_9 : f32 to vector<8x32xf32>
      %c0_10 = arith.constant 0 : index
      %c0_11 = arith.constant 0 : index
      %12 = vector.load %arg5[%c0_10, %c0_11] : memref<8x32xf32, #tpu.memory_space<vmem>>, vector<8x32xf32>
      tpu.vector_store %arg5[%c0_10, %c0_11], %11 {strides = array<i32>} : memref<8x32xf32, #tpu.memory_space<vmem>>, vector<8x32xf32>,
    } else {
    }
    %c0 = arith.constant 0 : index
    %c0_1 = arith.constant 0 : index
    %3 = vector.load %arg5[%c0, %c0_1] : memref<8x32xf32, #tpu.memory_space<vmem>>, vector<8x32xf32>
    %c0_2 = arith.constant 0 : index
    %c0_3 = arith.constant 0 : index
    %c0_4 = arith.constant 0 : index
    %4 = vector.load %arg2[%c0_2, %c0_3, %c0_4] : memref<8x8x32xf32, #tpu.memory_space<vmem>>, vector<8x8x32xf32>
    %cst = arith.constant dense<0.000000e+00> : vector<8x32xf32>
    %5 = vector.multi_reduction <add>, %4, %cst [1] : vector<8x8x32xf32> to vector<8x32xf32>
    %6 = arith.addf %3, %5 : vector<8x32xf32>
    %c0_5 = arith.constant 0 : index
    %c0_6 = arith.constant 0 : index
    %7 = vector.load %arg5[%c0_5, %c0_6] : memref<8x32xf32, #tpu.memory_space<vmem>>, vector<8x32xf32>
    tpu.vector_store %arg5[%c0_5, %c0_6], %6 {strides = array<i32>} : memref<8x32xf32, #tpu.memory_space<vmem>>, vector<8x32xf32>,
    %c0_i32_7 = arith.constant 0 : i32
    %8 = arith.cmpi eq, %arg1, %c0_i32_7 : i32
    %9 = arith.extui %8 : i1 to i32
    %c0_i32_8 = arith.constant 0 : i32
    %10 = arith.cmpi ne, %9, %c0_i32_8 : i32
    scf.if %10 {
      %c0_9 = arith.constant 0 : index
      %c0_10 = arith.constant 0 : index
      %11 = vector.load %arg3[%c0_9, %c0_10] : memref<33x32xf32, #tpu.memory_space<vmem>>, vector<32x32xf32>
      %c32 = arith.constant 32 : index
      %c0_11 = arith.constant 0 : index
      %12 = vector.load %arg3[%c32, %c0_11] : memref<33x32xf32, #tpu.memory_space<vmem>>, vector<1x32xf32>
      %c0_12 = arith.constant 0 : index
      %c0_13 = arith.constant 0 : index
      %13 = vector.load %arg5[%c0_12, %c0_13] : memref<8x32xf32, #tpu.memory_space<vmem>>, vector<8x32xf32>
      %cst_14 = arith.constant dense<0.000000e+00> : vector<8x32xf32>
      %14 = tpu.matmul %13, %11, %cst_14 {dimension_numbers = #tpu.dot_dimension_numbers<[1], [0], [0], [1], [0, 0, 1, 1], [], []>} : vector<8x32xf32>, vector<32x32xf32>, vector<8x32xf32> -> vector<8x32xf32>
      %15 = vector.broadcast %12 : vector<1x32xf32> to vector<8x32xf32>
      %16 = arith.addf %14, %15 : vector<8x32xf32>
      %c0_15 = arith.constant 0 : index
      %c0_16 = arith.constant 0 : index
      %17 = vector.load %arg4[%c0_15, %c0_16] : memref<8x32xf32, #tpu.memory_space<vmem>>, vector<8x32xf32>
      tpu.vector_store %arg4[%c0_15, %c0_16], %16 {strides = array<i32>} : memref<8x32xf32, #tpu.memory_space<vmem>>, vector<8x32xf32>,
    } else {
    }
    return
  }
  func.func @transform_0(%arg0: i32, %arg1: i32) -> (i32, i32, i32) {
    %c0_i32 = arith.constant 0 : i32
    %c0_i32_0 = arith.constant 0 : i32
    return %arg0, %arg1, %c0_i32 : i32, i32, i32
  }
  func.func @transform_1(%arg0: i32, %arg1: i32) -> (i32, i32) {
    %c0_i32 = arith.constant 0 : i32
    %c0_i32_0 = arith.constant 0 : i32
    %c0_i32_1 = arith.constant 0 : i32
    return %c0_i32, %c0_i32_0 : i32, i32
  }
  func.func @transform_2(%arg0: i32, %arg1: i32) -> (i32, i32) {
    %c0_i32 = arith.constant 0 : i32
    %c0_i32_0 = arith.constant 0 : i32
    return %arg0, %c0_i32 : i32, i32
  }
}

</mosaic_0001>

<llo_original>
// kernel: tpu_custom_call.1
$region0: #{tpu_custom_call.1}
  #allocation0 [shape = 'u32[]', space=smem, size = 0x4, offset = 0x4, fixed_abs, tag = 'smem constant byte address 0x4 - core index']
  #allocation1 [shape = 'u32[72,128]{1,0:T(1,128)}', space=vmem, size = 0x9000, scoped, tag = 'internal scratch']
  #allocation2 [shape = 'f32[8,32]{1,0:T(8,128)}', space=vmem, size = 0x1000, scoped, tag = 'scratch operand']
  %s0 = inlined_call_operand.vmem [shape: f32[8,8,32], index: 0, kind: input, shape index: {}]
  %s1 = inlined_call_operand.vmem [shape: f32[33,32], index: 1, kind: input, shape index: {}]
  %s2 = inlined_call_operand.hbm [shape: f32[8,32], index: 2, kind: output, shape index: {}]
  %s3 = sld [smem:[#allocation0]]
  $region26: #{tpu_custom_call.1} parent=0
    _
  %s5 = ssub.s32 1, %s3
  %s6 = scalar_select 0, %s5, %s3
  $region1: #{tpu_custom_call.1} parent=0
    #allocation3 [shape = 'u8[4096]{0}', space=vmem, size = 0x1000, scoped, tag = 'output window, operand 0, single buffered']
    #allocation4 [shape = 's32[1]{0}', space=sflag, size = 0x4, scoped, tag = 'scoped memory for tpu_custom_call.1']
    %7 = vsyncpa [#allocation4], 0
    // Predicated region
    $region2: #{tpu_custom_call.1} parent=1 // pred_check
      _
    $region3: #{tpu_custom_call.1} parent=1 // pred_check_branch
      %9 = sbr.rel (0) target = $region5
    $region4: #{tpu_custom_call.1} parent=1 // pred_region
      _
    $region5: #{tpu_custom_call.1} parent=1 // pred_fallthru
      _
    // Predicated region
    $region6: #{tpu_custom_call.1} parent=1 // pred_check
      _
    $region7: #{tpu_custom_call.1} parent=1 // pred_check_branch
      %11 = sbr.rel (0) target = $region9
    $region8: #{tpu_custom_call.1} parent=1 // pred_region
      _
    $region9: #{tpu_custom_call.1} parent=1 // pred_fallthru
      _
    %p12 = scmp.eq.s32.totalorder 0, 0
    // Predicated region
    $region10: #{tpu_custom_call.1} parent=1 // pred_check
      %p13 = pneg %p12
    $region11: #{tpu_custom_call.1} parent=1 // pred_check_branch
      %15 = sbr.rel (%p13) target = $region13
    $region12: #{tpu_custom_call.1} parent=1 // pred_region
      %vm16 = vcmask 261120
      %17 = vst.msk [vmem:[#allocation2] sm:$0xff] %vm16, 0.0
    $region13: #{tpu_custom_call.1} parent=1 // pred_fallthru
      _
    %v18 = vld [vmem:[#allocation2] sm:$0xff]
    %v19 = vld [vmem:[%s0] sm:$0xff]
    %v20 = vld [vmem:[%s0 + $0x8] sm:$0xff]
    %v21 = vld [vmem:[%s0 + $0x10] sm:$0xff]
    %v22 = vld [vmem:[%s0 + $0x18] sm:$0xff]
    %v23 = vld [vmem:[%s0 + $0x20] sm:$0xff]
    %v24 = vld [vmem:[%s0 + $0x28] sm:$0xff]
    %v25 = vld [vmem:[%s0 + $0x30] sm:$0xff]
    %v26 = vld [vmem:[%s0 + $0x38] sm:$0xff]
    %vm27 = vcmask 261120
    %v28 = vsel %vm27, %v19, 0.0
    %v29 = vrot.slane %v28, 4
    %v30 = vadd.f32 %v28, %v29
    %v31 = vrot.slane %v30, 2
    %v32 = vadd.f32 %v30, %v31
    %v33 = vrot.slane %v32, 1
    %v34 = vadd.f32 %v32, %v33
    %v35 = vsel %vm27, %v20, 0.0
    %v36 = vrot.slane %v35, 4
    %v37 = vadd.f32 %v35, %v36
    %v38 = vrot.slane %v37, 2
    %v39 = vadd.f32 %v37, %v38
    %v40 = vrot.slane %v39, 1
    %v41 = vadd.f32 %v39, %v40
    %v42 = vsel %vm27, %v21, 0.0
    %v43 = vrot.slane %v42, 4
    %v44 = vadd.f32 %v42, %v43
    %v45 = vrot.slane %v44, 2
    %v46 = vadd.f32 %v44, %v45
    %v47 = vrot.slane %v46, 1
    %v48 = vadd.f32 %v46, %v47
    %v49 = vsel %vm27, %v22, 0.0
    %v50 = vrot.slane %v49, 4
    %v51 = vadd.f32 %v49, %v50
    %v52 = vrot.slane %v51, 2
    %v53 = vadd.f32 %v51, %v52
    %v54 = vrot.slane %v53, 1
    %v55 = vadd.f32 %v53, %v54
    %v56 = vsel %vm27, %v23, 0.0
    %v57 = vrot.slane %v56, 4
    %v58 = vadd.f32 %v56, %v57
    %v59 = vrot.slane %v58, 2
    %v60 = vadd.f32 %v58, %v59
    %v61 = vrot.slane %v60, 1
    %v62 = vadd.f32 %v60, %v61
    %v63 = vsel %vm27, %v24, 0.0
    %v64 = vrot.slane %v63, 4
    %v65 = vadd.f32 %v63, %v64
    %v66 = vrot.slane %v65, 2
    %v67 = vadd.f32 %v65, %v66
    %v68 = vrot.slane %v67, 1
    %v69 = vadd.f32 %v67, %v68
    %v70 = vsel %vm27, %v25, 0.0
    %v71 = vrot.slane %v70, 4
    %v72 = vadd.f32 %v70, %v71
    %v73 = vrot.slane %v72, 2
    %v74 = vadd.f32 %v72, %v73
    %v75 = vrot.slane %v74, 1
    %v76 = vadd.f32 %v74, %v75
    %v77 = vsel %vm27, %v26, 0.0
    %v78 = vrot.slane %v77, 4
    %v79 = vadd.f32 %v77, %v78
    %v80 = vrot.slane %v79, 2
    %v81 = vadd.f32 %v79, %v80
    %v82 = vrot.slane %v81, 1
    %v83 = vadd.f32 %v81, %v82
    %vm92 = vcmask 1041409
    %v93 = vsel %vm92, %v41, %v34
    %vm94 = vcmask 1042434
    %v95 = vsel %vm94, %v48, %v93
    %vm96 = vcmask 1043459
    %v97 = vsel %vm96, %v55, %v95
    %vm98 = vcmask 1044484
    %v99 = vsel %vm98, %v62, %v97
    %vm100 = vcmask 1045509
    %v101 = vsel %vm100, %v69, %v99
    %vm102 = vcmask 1046534
    %v103 = vsel %vm102, %v76, %v101
    %vm104 = vcmask 1047559
    %v105 = vsel %vm104, %v83, %v103
    %v107 = vadd.f32 %v18, %v105
    %108 = vst.msk [vmem:[#allocation2] sm:$0xff] %vm27, %v107
    // Predicated region
    $region14: #{tpu_custom_call.1} parent=1 // pred_check
      %p109 = pneg %p12
    $region15: #{tpu_custom_call.1} parent=1 // pred_check_branch
      %111 = sbr.rel (%p109) target = $region17
    $region16: #{tpu_custom_call.1} parent=1 // pred_region
      %v112 = vld [vmem:[%s1] sm:$0xff]
      %v113 = vld [vmem:[%s1 + $0x8] sm:$0xff]
      %v114 = vld [vmem:[%s1 + $0x10] sm:$0xff]
      %v115 = vld [vmem:[%s1 + $0x18] sm:$0xff]
      %v116 = vld [vmem:[%s1 + $0x20] sm:$0x1]
      %v117 = vld [vmem:[#allocation2] sm:$0xff]
      %v118 = vperm.slane %v116, 0
      %v120 = vsel %vm27, %v117, 0
      %122 = vmatpush.msra.mxu0 0.0
      %123 = vmatpush.msra.mxu0 0.0
      %124 = vmatpush.msra.mxu0 0.0
      %125 = vmatpush.msra.mxu0 0.0
      %126 = vmatpush.msra.mxu0 0.0
      %127 = vmatpush.msra.mxu0 0.0
      %128 = vmatpush.msra.mxu0 0.0
      %129 = vmatpush.msra.mxu0 0.0
      %130 = vmatpush.msra.mxu0 0.0
      %131 = vmatpush.msra.mxu0 0.0
      %132 = vmatpush.msra.mxu0 0.0
      %133 = vmatpush.msra.mxu0 0.0
      %134 = vmatpush.msra.mxu0 %v115
      %135 = vmatpush.msra.mxu0 %v114
      %136 = vmatpush.msra.mxu0 %v113
      %137 = vmatpush.msra.mxu0 %v112
      %138 = vmatmul.f32.gmra.mxu0 %v120
      %v139 = vpop.f32.mrf.mxu0
      %v140 = vadd.f32 %v118, %v139
      %141 = vdwg.mxu0
      %142 = vst.msk [vmem:[#allocation3] sm:$0xff] %vm27, %v140
    $region17: #{tpu_custom_call.1} parent=1 // pred_fallthru
      _
    // Predicated region
    $region18: #{tpu_custom_call.1} parent=1 // pred_check
      _
    $region19: #{tpu_custom_call.1} parent=1 // pred_check_branch
      %144 = sbr.rel (0) target = $region21
    $region20: #{tpu_custom_call.1} parent=1 // pred_region
      %146 = vsyncadd [#allocation4], 0
      %s148 = sshll.u32 [#allocation3], 4
      %s149 = int_to_ptr.vmem [resolvable:$true] %s148
      %s150 = sshll.u32 %s2, 4
      %s151 = int_to_ptr.hbm [resolvable:$true] %s150
      %153 = dma.vmem_to_hbm [thread:$0]  %s149, 128, %s151, [#allocation4]
    $region21: #{tpu_custom_call.1} parent=1 // pred_fallthru
      _
    // Predicated region
    $region22: #{tpu_custom_call.1} parent=1 // pred_check
      _
    $region23: #{tpu_custom_call.1} parent=1 // pred_check_branch
      %155 = sbr.rel (0) target = $region25
    $region24: #{tpu_custom_call.1} parent=1 // pred_region
      %157 = dma.done [#allocation4], 128
    $region25: #{tpu_custom_call.1} parent=1 // pred_fallthru
      _
    %158 = vsyncpa [#allocation4], 1

</llo_original>
